<compile_context>
chip_gen: v5e
topology: v5e:2x2
jax: 0.10.0
libtpu: 0.0.40
codegen_flags: <defaults>
</compile_context>

<pallas_src>
import jax
import jax.numpy as jnp
import numpy as np
from typing import NamedTuple, Tuple
from jax.experimental import pallas as pl
from jax.experimental.pallas import tpu as pltpu


def _round_up(x, m):
    return ((x + m - 1) // m) * m


# --------------------------------------------------------------------------- #
# Kernel
# --------------------------------------------------------------------------- #
def _vae_decoder_kernel(z_ref, w1_ref, b1_ref, w2_ref, b2_ref, o_ref):
    # Grid = (F-tile jf [outer], batch-tile ib [inner]); both axes independent.
    # z_ref : (TB, Lp)   mxu_dtype   batch tile of latents
    # w1_ref: (Lp, Hp)   mxu_dtype   decoder_layerZ weight (constant index)
    # b1_ref: (1, Hp)    f32         decoder_layerZ bias   (constant index)
    # w2_ref: (Hp, TF)   mxu_dtype   output_layer weight, F-tile jf
    # b2_ref: (1, TF)    f32         output_layer bias,   F-tile jf
    # o_ref : (TB, TF)   f32         output tile

    # decoder_layerZ: zv = z @ W1 + b1   (MXU, f32 accumulation)
    zv = jnp.dot(z_ref[...], w1_ref[...],
                 preferred_element_type=jnp.float32) + b1_ref[...]
    # activation(tanh) in f32 (EUP), cast once to the MXU dtype.
    hd = jnp.tanh(zv).astype(w2_ref.dtype)
    # output_layer F-tile: y = hd @ W2[:, jf] + b2[jf]
    y = jnp.dot(hd, w2_ref[...],
                preferred_element_type=jnp.float32) + b2_ref[...]
    # torch.exp(...) in f32 (EUP); no extra per-element work in the inner loop
    # (small-H decoders are exp/EUP-bound, not MXU-bound).
    o_ref[...] = jnp.exp(y).astype(o_ref.dtype)


# --------------------------------------------------------------------------- #
# Parameter preparation (do this ONCE, reuse across calls)
# --------------------------------------------------------------------------- #
class VAEDecoderParams(NamedTuple):
    w1: jax.Array            # (Lp, Hp) mxu_dtype, zero-padded
    b1: jax.Array            # (1, Hp)  f32
    w2: jax.Array            # (Hp, Fp) mxu_dtype, zero-padded
    b2: jax.Array            # (1, Fp)  f32
    dims: Tuple[int, int, int]   # true (L, H, F)


def prepare_vae_decoder_params(w1, b1, w2, b2, *, mxu_dtype=jnp.bfloat16):
    """Pad + cast the decoder parameters once.

    w1: (L, H), b1: (H,)  -- decoder_layerZ (pass torch weight transposed: W.T)
    w2: (H, F), b2: (F,)  -- output_layer   (pass torch weight transposed: W.T)

    Zero padding is mathematically inert: padded W1 columns / b1 entries are 0
    -> zv_pad = 0 -> tanh = 0; padded W2 rows are 0 -> padded hidden contributes
    nothing; padded output columns / batch rows are sliced off at the end.
    """
    L, H = w1.shape
    H2, F = w2.shape
    assert H == H2 and b1.shape == (H,) and b2.shape == (F,)
    f32 = jnp.float32
    Lp = _round_up(L, 128)    # lane-dense contraction dim of matmul 1
    Hp = _round_up(H, 256)    # 256-aligned contraction dim of matmul 2 (v6e/v7x MXU)
    Fp = _round_up(F, 128)    # lane-dense output dim

    w1_p = jnp.zeros((Lp, Hp), f32).at[:L, :H].set(w1.astype(f32)).astype(mxu_dtype)
    b1_p = jnp.zeros((1, Hp), f32).at[0, :H].set(b1.astype(f32))
    w2_p = jnp.zeros((Hp, Fp), f32).at[:H, :F].set(w2.astype(f32)).astype(mxu_dtype)
    b2_p = jnp.zeros((1, Fp), f32).at[0, :F].set(b2.astype(f32))
    return VAEDecoderParams(w1_p, b1_p, w2_p, b2_p, (L, H, F))


# --------------------------------------------------------------------------- #
# Tiling / VMEM budget
# --------------------------------------------------------------------------- #
def _physical_vmem_bytes():
    try:
        info = pltpu.get_tpu_info()
        for attr in ("vmem_capacity_bytes", "vmem_bytes", "vmem_size_bytes"):
            v = getattr(info, attr, None)
            if v:
                return int(v)
    except Exception:
        pass
    return 128 * 1024 * 1024


def _default_vmem_budget_bytes():
    # ~70% of physical, capped at 64 MiB:
    #   v5e/v6e (128 MiB physical) -> 64 MiB ; v7x (64 MiB physical) -> ~45 MiB.
    return min(int(_physical_vmem_bytes() * 0.70), 64 * 1024 * 1024)


def _vmem_footprint_bytes(tb, tf, Lp, Hp, itm):
    return (2 * tb * Lp * itm        # z tile (double-buffered)
            + 2 * Lp * Hp * itm      # W1 (constant index; Pallas still 2 bufs)
            + 2 * Hp * 4             # b1
            + 2 * Hp * tf * itm      # W2 tile (double-buffered)
            + 2 * tf * 4             # b2
            + 2 * tb * tf * 4        # f32 output tile (double-buffered)
            + 2 * tb * Hp * 4)       # in-kernel zv/hd temporaries (slack)


def _derive_tiles(B, Lp, Hp, Fp, itm, budget, tile_b, tile_f):
    bcap = _round_up(max(B, 1), 16)
    if tile_b is not None:
        tb_cands = [min(_round_up(tile_b, 16), bcap)]
    else:
        tb_cands = [t for t in (1024, 512, 256, 128, 64, 32, 16) if t <= bcap] or [16]
    if tile_f is not None:
        tf = min(_round_up(tile_f, 128), Fp)
        if Fp % tf:
            tf = 128          # 128 always divides Fp
        tf_cands = [tf]
    else:
        tf_cands = [t for t in (4096, 2048, 1024, 512, 256, 128)
                    if t <= Fp and Fp % t == 0]

    best = None
    for tf in tf_cands:
        for tb in tb_cands:
            if _vmem_footprint_bytes(tb, tf, Lp, Hp, itm) <= budget:
                key = (tb * tf, tf)       # maximize per-step work, prefer wide F
                if best is None or key > best[0]:
                    best = (key, tb, tf)
    if best is None:                       # tiny budget fallback
        return tb_cands[-1], tf_cands[-1]
    tb, tf = best[1], best[2]

    # v7x megacore: make sure the grid has >= 2 steps so both TensorCores work.
    if tile_b is None and (Fp // tf) == 1 and B >= 32:
        if _round_up(B, tb) // tb < 2:
            tb = max(16, _round_up(-(-B // 2), 16))
    return tb, tf


# --------------------------------------------------------------------------- #
# Wrapper
# --------------------------------------------------------------------------- #
def vae_decoder(z, params: VAEDecoderParams, *, tile_b=None, tile_f=None,
                vmem_budget_bytes=None):
    """VAE_decoder.forward: exp(output_layer(tanh(decoder_layerZ(z)))).

    z: (B, L) float; params: from prepare_vae_decoder_params(). Returns (B, F) f32.
    """
    B, L = z.shape
    L0, H, F = params.dims
    assert L == L0, f"latent dim mismatch: {L} vs {L0}"
    mxu_dtype = params.w1.dtype
    itm = jnp.dtype(mxu_dtype).itemsize
    Lp, Hp = params.w1.shape
    Hp2, Fp = params.w2.shape
    assert Hp == Hp2

    if vmem_budget_bytes is None:
        vmem_budget_bytes = _default_vmem_budget_bytes()
    tb, tf = _derive_tiles(B, Lp, Hp, Fp, itm, vmem_budget_bytes, tile_b, tile_f)
    Bp = _round_up(B, tb)
    nf, nb = Fp // tf, Bp // tb
    footprint = _vmem_footprint_bytes(tb, tf, Lp, Hp, itm)

    # Only the (small) activation z is padded/cast per call; weights are reused.
    z32 = z.astype(jnp.float32)
    if (Bp, Lp) != (B, L):
        z_p = jnp.zeros((Bp, Lp), jnp.float32).at[:B, :L].set(z32).astype(mxu_dtype)
    else:
        z_p = z32.astype(mxu_dtype)

    # Accurate, advisory cost: W2/b2/W1/b1/out one HBM pass; z re-read per F tile;
    # matmul-1 + tanh recomputed per F tile.
    cost = pl.CostEstimate(
        flops=int(2 * Bp * Hp * (nf * Lp + Fp)),
        transcendentals=int(Bp * (nf * Hp + Fp)),
        bytes_accessed=int(nf * Bp * Lp * itm            # z
                           + Lp * Hp * itm + Hp * 4      # W1, b1
                           + Hp * Fp * itm + Fp * 4      # W2, b2 (single pass)
                           + Bp * Fp * 4),               # output
    )

    out_p = pl.pallas_call(
        _vae_decoder_kernel,
        out_shape=jax.ShapeDtypeStruct((Bp, Fp), jnp.float32),
        grid_spec=pltpu.PrefetchScalarGridSpec(
            num_scalar_prefetch=0,
            # F-tile outer, batch-tile inner -> W2 streamed from HBM once total.
            grid=(nf, nb),
            in_specs=[
                pl.BlockSpec((tb, Lp), lambda jf, ib: (ib, 0)),   # z: batch tile
                pl.BlockSpec((Lp, Hp), lambda jf, ib: (0, 0)),    # W1: resident
                pl.BlockSpec((1, Hp),  lambda jf, ib: (0, 0)),    # b1: resident
                pl.BlockSpec((Hp, tf), lambda jf, ib: (0, jf)),   # W2: F-tiled (outer only)
                pl.BlockSpec((1, tf),  lambda jf, ib: (0, jf)),   # b2: F-tiled
            ],
            out_specs=pl.BlockSpec((tb, tf), lambda jf, ib: (ib, jf)),
        ),
        compiler_params=pltpu.CompilerParams(
            # No cross-step state -> both axes parallel (megacore on v7x).
            dimension_semantics=("parallel", "parallel"),
            vmem_limit_bytes=int(min(128 * 1024 * 1024,
                                     max(vmem_budget_bytes,
                                         footprint + (1 << 20)))),
        ),
        cost_estimate=cost,
    )(z_p, params.w1, params.b1, params.w2, params.b2)

    return out_p[:B, :F]


# --------------------------------------------------------------------------- #
# Reference + self-test
# --------------------------------------------------------------------------- #
def vae_decoder_ref(z, w1, b1, w2, b2):
    """Numpy float64 reference mirroring the PyTorch forward."""
    z64 = np.asarray(z, np.float64)
    hd = np.tanh(z64 @ np.asarray(w1, np.float64) + np.asarray(b1, np.float64))
    return np.exp(hd @ np.asarray(w2, np.float64) + np.asarray(b2, np.float64))


if __name__ == "__main__":
    def make_inputs(B, L, H, F, key):
        kz, kw1, kb1, kw2, kb2 = jax.random.split(key, 5)
        z = jax.random.normal(kz, (B, L), dtype=jnp.float32)
        # Small-scale synthetic params so exp() stays well-conditioned.
        w1 = jax.random.normal(kw1, (L, H), dtype=jnp.float32) * 0.1
        b1 = jax.random.normal(kb1, (H,), dtype=jnp.float32) * 0.1
        w2 = jax.random.normal(kw2, (H, F), dtype=jnp.float32) * 0.1
        b2 = jax.random.normal(kb2, (F,), dtype=jnp.float32) * 0.1
        return z, w1, b1, w2, b2

    # --- Test 1: module-sized shapes, default bf16 MXU path, auto tiles ------
    B, L, H, F = 8, 32, 64, 256
    z, w1, b1, w2, b2 = make_inputs(B, L, H, F, jax.random.PRNGKey(0))
    params_bf16 = prepare_vae_decoder_params(w1, b1, w2, b2)   # prepared ONCE
    out1 = jax.block_until_ready(vae_decoder(z, params_bf16))
    ref1 = vae_decoder_ref(z, w1, b1, w2, b2)
    np.testing.assert_allclose(np.asarray(out1), ref1.astype(np.float32),
                               rtol=5e-2, atol=5e-2)

    # --- Test 2: multi-tile grid (forced small tiles), f32 params, padding ---
    B2, L2, H2, F2 = 40, 32, 96, 512          # Bp=48, Hp=256, Fp=512 exercised
    z2, w1_2, b1_2, w2_2, b2_2 = make_inputs(B2, L2, H2, F2, jax.random.PRNGKey(1))
    params_f32 = prepare_vae_decoder_params(w1_2, b1_2, w2_2, b2_2,
                                            mxu_dtype=jnp.float32)
    out2 = jax.block_until_ready(
        vae_decoder(z2, params_f32, tile_b=16, tile_f=128))
    ref2 = vae_decoder_ref(z2, w1_2, b1_2, w2_2, b2_2)
    # Tolerance covers possible bf16 demotion of f32 MXU operands at default
    # matmul precision on TPU.
    np.testing.assert_allclose(np.asarray(out2), ref2.astype(np.float32),
                               rtol=2e-2, atol=2e-2)

    print("KERNEL_OK")
</pallas_src>

<mosaic_0001>
module attributes {stable_mosaic.version = 11 : i64} {
  func.func @_vae_decoder_kernel(%arg0: i32, %arg1: i32, %arg2: memref<16x128xbf16, #tpu.memory_space<vmem>>, %arg3: memref<128x256xbf16, #tpu.memory_space<vmem>>, %arg4: memref<1x256xf32, #tpu.memory_space<vmem>>, %arg5: memref<256x256xbf16, #tpu.memory_space<vmem>>, %arg6: memref<1x256xf32, #tpu.memory_space<vmem>>, %arg7: memref<16x256xf32, #tpu.memory_space<vmem>>) attributes {dimension_semantics = [#tpu.dimension_semantics<parallel>, #tpu.dimension_semantics<parallel>], iteration_bounds = array<i64: 1, 1>, scalar_prefetch = 0 : i64, scratch_operands = 0 : i64, tpu.core_type = #tpu.core_type<tc>, window_params = [{transform_indices = @transform_0, window_bounds = array<i64: 16, 128>}, {pipeline_mode = #tpu.pipeline_mode<synchronous>, transform_indices = @transform_1, window_bounds = array<i64: 128, 256>}, {pipeline_mode = #tpu.pipeline_mode<synchronous>, transform_indices = @transform_2, window_bounds = array<i64: 1, 256>}, {transform_indices = @transform_3, window_bounds = array<i64: 256, 256>}, {transform_indices = @transform_4, window_bounds = array<i64: 1, 256>}, {transform_indices = @transform_5, window_bounds = array<i64: 16, 256>}]} {
    %c0 = arith.constant 0 : index
    %c0_0 = arith.constant 0 : index
    %0 = vector.load %arg2[%c0, %c0_0] : memref<16x128xbf16, #tpu.memory_space<vmem>>, vector<16x128xbf16>
    %c0_1 = arith.constant 0 : index
    %c0_2 = arith.constant 0 : index
    %1 = vector.load %arg3[%c0_1, %c0_2] : memref<128x256xbf16, #tpu.memory_space<vmem>>, vector<128x256xbf16>
    %cst = arith.constant dense<0.000000e+00> : vector<16x256xf32>
    %2 = tpu.matmul %0, %1, %cst {dimension_numbers = #tpu.dot_dimension_numbers<[1], [0], [0], [1], [0, 0, 1, 1], [], []>} : vector<16x128xbf16>, vector<128x256xbf16>, vector<16x256xf32> -> vector<16x256xf32>
    %c0_3 = arith.constant 0 : index
    %c0_4 = arith.constant 0 : index
    %3 = vector.load %arg4[%c0_3, %c0_4] : memref<1x256xf32, #tpu.memory_space<vmem>>, vector<1x256xf32>
    %4 = vector.broadcast %3 : vector<1x256xf32> to vector<16x256xf32>
    %5 = arith.addf %2, %4 : vector<16x256xf32>
    %6 = math.tanh %5 : vector<16x256xf32>
    %7 = arith.truncf %6 : vector<16x256xf32> to vector<16x256xbf16>
    %c0_5 = arith.constant 0 : index
    %c0_6 = arith.constant 0 : index
    %8 = vector.load %arg5[%c0_5, %c0_6] : memref<256x256xbf16, #tpu.memory_space<vmem>>, vector<256x256xbf16>
    %cst_7 = arith.constant dense<0.000000e+00> : vector<16x256xf32>
    %9 = tpu.matmul %7, %8, %cst_7 {dimension_numbers = #tpu.dot_dimension_numbers<[1], [0], [0], [1], [0, 0, 1, 1], [], []>} : vector<16x256xbf16>, vector<256x256xbf16>, vector<16x256xf32> -> vector<16x256xf32>
    %c0_8 = arith.constant 0 : index
    %c0_9 = arith.constant 0 : index
    %10 = vector.load %arg6[%c0_8, %c0_9] : memref<1x256xf32, #tpu.memory_space<vmem>>, vector<1x256xf32>
    %11 = vector.broadcast %10 : vector<1x256xf32> to vector<16x256xf32>
    %12 = arith.addf %9, %11 : vector<16x256xf32>
    %13 = math.exp %12 : vector<16x256xf32>
    %c0_10 = arith.constant 0 : index
    %c0_11 = arith.constant 0 : index
    %14 = vector.load %arg7[%c0_10, %c0_11] : memref<16x256xf32, #tpu.memory_space<vmem>>, vector<16x256xf32>
    tpu.vector_store %arg7[%c0_10, %c0_11], %13 {strides = array<i32>} : memref<16x256xf32, #tpu.memory_space<vmem>>, vector<16x256xf32>,
    return
  }
  func.func @transform_0(%arg0: i32, %arg1: i32) -> (i32, i32) {
    %c0_i32 = arith.constant 0 : i32
    %c0_i32_0 = arith.constant 0 : i32
    return %arg1, %c0_i32 : i32, i32
  }
  func.func @transform_1(%arg0: i32, %arg1: i32) -> (i32, i32) {
    %c0_i32 = arith.constant 0 : i32
    %c0_i32_0 = arith.constant 0 : i32
    %c0_i32_1 = arith.constant 0 : i32
    return %c0_i32, %c0_i32_0 : i32, i32
  }
  func.func @transform_2(%arg0: i32, %arg1: i32) -> (i32, i32) {
    %c0_i32 = arith.constant 0 : i32
    %c0_i32_0 = arith.constant 0 : i32
    %c0_i32_1 = arith.constant 0 : i32
    return %c0_i32, %c0_i32_0 : i32, i32
  }
  func.func @transform_3(%arg0: i32, %arg1: i32) -> (i32, i32) {
    %c0_i32 = arith.constant 0 : i32
    %c0_i32_0 = arith.constant 0 : i32
    return %c0_i32, %arg0 : i32, i32
  }
  func.func @transform_4(%arg0: i32, %arg1: i32) -> (i32, i32) {
    %c0_i32 = arith.constant 0 : i32
    %c0_i32_0 = arith.constant 0 : i32
    return %c0_i32, %arg0 : i32, i32
  }
  func.func @transform_5(%arg0: i32, %arg1: i32) -> (i32, i32) {
    %c0_i32 = arith.constant 0 : i32
    return %arg1, %arg0 : i32, i32
  }
}

</mosaic_0001>

<llo_original>
// kernel: tpu_custom_call.1
$region0: #{tpu_custom_call.1}
  #allocation0 [shape = 'u32[]', space=smem, size = 0x4, offset = 0x4, fixed_abs, tag = 'smem constant byte address 0x4 - core index']
  #allocation1 [shape = 'u32[72,128]{1,0:T(1,128)}', space=vmem, size = 0x9000, scoped, tag = 'internal scratch']
  %s0 = inlined_call_operand.hbm [shape: bf16[16,128], index: 0, kind: input, shape index: {}]
  %s1 = inlined_call_operand.hbm [shape: bf16[128,256], index: 1, kind: input, shape index: {}]
  %s2 = inlined_call_operand.hbm [shape: f32[1,256], index: 2, kind: input, shape index: {}]
  %s3 = inlined_call_operand.hbm [shape: bf16[256,256], index: 3, kind: input, shape index: {}]
  %s4 = inlined_call_operand.vmem [shape: f32[1,256], index: 4, kind: input, shape index: {}]
  %s5 = inlined_call_operand.hbm [shape: f32[16,256], index: 5, kind: output, shape index: {}]
  %s6 = sld [smem:[#allocation0]]
  $region46: #{tpu_custom_call.1} parent=0
    _
  %s8 = ssub.s32 1, %s6
  %s9 = scalar_select 0, %s8, %s6
  $region1: #{tpu_custom_call.1} parent=0
    #allocation2 [shape = 'u8[4096]{0}', space=vmem, size = 0x1000, scoped, tag = 'input window, operand 0, single buffered']
    #allocation3 [shape = 's32[1]{0}', space=sflag, size = 0x4, scoped, tag = 'scoped memory for tpu_custom_call.1']
    #allocation4 [shape = 's32[1]{0}', space=sflag, size = 0x4, scoped, tag = 'scoped memory for tpu_custom_call.1']
    #allocation5 [shape = 'u8[65536]{0}', space=vmem, size = 0x10000, scoped, tag = 'input window, operand 1, single buffered']
    #allocation6 [shape = 's32[1]{0}', space=sflag, size = 0x4, scoped, tag = 'scoped memory for tpu_custom_call.1']
    #allocation7 [shape = 'u8[1024]{0}', space=vmem, size = 0x400, scoped, tag = 'input window, operand 2, single buffered']
    #allocation8 [shape = 'u8[131072]{0}', space=vmem, size = 0x20000, scoped, tag = 'input window, operand 3, single buffered']
    #allocation9 [shape = 's32[1]{0}', space=sflag, size = 0x4, scoped, tag = 'scoped memory for tpu_custom_call.1']
    #allocation10 [shape = 'u8[16384]{0}', space=vmem, size = 0x4000, scoped, tag = 'output window, operand 0, single buffered']
    %10 = vsyncpa [#allocation3], 0
    %11 = vsyncpa [#allocation6], 0
    %12 = vsyncpa [#allocation9], 0
    %13 = vsyncpa [#allocation4], 0
    // Predicated region
    $region2: #{tpu_custom_call.1} parent=1 // pred_check
      _
    $region3: #{tpu_custom_call.1} parent=1 // pred_check_branch
      %15 = sbr.rel (0) target = $region5
    $region4: #{tpu_custom_call.1} parent=1 // pred_region
      %17 = vsyncadd [#allocation3], 0
      %s18 = sshll.u32 %s0, 4
      %s19 = int_to_ptr.hbm [resolvable:$true] %s18
      %s20 = sshll.u32 [#allocation2], 4
      %s21 = int_to_ptr.vmem [resolvable:$true] %s20
      %26 = dma.hbm_to_vmem [thread:$0]  %s19, 128, %s21, [#allocation3], 64, 64, 4
    $region5: #{tpu_custom_call.1} parent=1 // pred_fallthru
      _
    // Predicated region
    $region6: #{tpu_custom_call.1} parent=1 // pred_check
      _
    $region7: #{tpu_custom_call.1} parent=1 // pred_check_branch
      %28 = sbr.rel (0) target = $region9
    $region8: #{tpu_custom_call.1} parent=1 // pred_region
      %30 = vsyncadd [#allocation6], 0
      %s31 = sshll.u32 %s1, 4
      %s32 = int_to_ptr.hbm [resolvable:$true] %s31
      %s33 = sshll.u32 [#allocation5], 4
      %s34 = int_to_ptr.vmem [resolvable:$true] %s33
      %39 = dma.hbm_to_vmem [thread:$0]  %s32, 2048, %s34, [#allocation6], 128, 128, 8
    $region9: #{tpu_custom_call.1} parent=1 // pred_fallthru
      _
    // Predicated region
    $region10: #{tpu_custom_call.1} parent=1 // pred_check
      _
    $region11: #{tpu_custom_call.1} parent=1 // pred_check_branch
      %41 = sbr.rel (0) target = $region13
    $region12: #{tpu_custom_call.1} parent=1 // pred_region
      %43 = vsyncadd [#allocation6], 0
      %s45 = sshll.u32 %s2, 4
      %s46 = int_to_ptr.hbm [resolvable:$true] %s45
      %s47 = sshll.u32 [#allocation7], 4
      %s48 = int_to_ptr.vmem [resolvable:$true] %s47
      %50 = dma.hbm_to_vmem [thread:$0]  %s46, 32, %s48, [#allocation6]
    $region13: #{tpu_custom_call.1} parent=1 // pred_fallthru
      _
    // Predicated region
    $region14: #{tpu_custom_call.1} parent=1 // pred_check
      _
    $region15: #{tpu_custom_call.1} parent=1 // pred_check_branch
      %52 = sbr.rel (0) target = $region17
    $region16: #{tpu_custom_call.1} parent=1 // pred_region
      %54 = vsyncadd [#allocation9], 0
      %s55 = sshll.u32 %s3, 4
      %s56 = int_to_ptr.hbm [resolvable:$true] %s55
      %s57 = sshll.u32 [#allocation8], 4
      %s58 = int_to_ptr.vmem [resolvable:$true] %s57
      %63 = dma.hbm_to_vmem [thread:$0]  %s56, 4096, %s58, [#allocation9], 128, 128, 8
    $region17: #{tpu_custom_call.1} parent=1 // pred_fallthru
      _
    // Predicated region
    $region18: #{tpu_custom_call.1} parent=1 // pred_check
      _
    $region19: #{tpu_custom_call.1} parent=1 // pred_check_branch
      %65 = sbr.rel (0) target = $region21
    $region20: #{tpu_custom_call.1} parent=1 // pred_region
      _
    $region21: #{tpu_custom_call.1} parent=1 // pred_fallthru
      _
    // Predicated region
    $region22: #{tpu_custom_call.1} parent=1 // pred_check
      _
    $region23: #{tpu_custom_call.1} parent=1 // pred_check_branch
      %67 = sbr.rel (0) target = $region25
    $region24: #{tpu_custom_call.1} parent=1 // pred_region
      %69 = dma.done [#allocation3], 128
    $region25: #{tpu_custom_call.1} parent=1 // pred_fallthru
      _
    // Predicated region
    $region26: #{tpu_custom_call.1} parent=1 // pred_check
      _
    $region27: #{tpu_custom_call.1} parent=1 // pred_check_branch
      %71 = sbr.rel (0) target = $region29
    $region28: #{tpu_custom_call.1} parent=1 // pred_region
      %73 = dma.done [#allocation6], 2048
    $region29: #{tpu_custom_call.1} parent=1 // pred_fallthru
      _
    // Predicated region
    $region30: #{tpu_custom_call.1} parent=1 // pred_check
      _
    $region31: #{tpu_custom_call.1} parent=1 // pred_check_branch
      %75 = sbr.rel (0) target = $region33
    $region32: #{tpu_custom_call.1} parent=1 // pred_region
      %77 = dma.done [#allocation6], 32
    $region33: #{tpu_custom_call.1} parent=1 // pred_fallthru
      _
    // Predicated region
    $region34: #{tpu_custom_call.1} parent=1 // pred_check
      _
    $region35: #{tpu_custom_call.1} parent=1 // pred_check_branch
      %79 = sbr.rel (0) target = $region37
    $region36: #{tpu_custom_call.1} parent=1 // pred_region
      %81 = dma.done [#allocation9], 4096
    $region37: #{tpu_custom_call.1} parent=1 // pred_fallthru
      _
    %v82 = vld [vmem:[#allocation2] sm:$0xf]
    %v83 = vld [vmem:[#allocation2 + $0x4] sm:$0xf]
    %v84 = vld [vmem:[#allocation5] sm:$0xff]
    %v85 = vld [vmem:[#allocation5 + $0x8] sm:$0xff]
    %v86 = vld [vmem:[#allocation5 + $0x10] sm:$0xff]
    %v87 = vld [vmem:[#allocation5 + $0x18] sm:$0xff]
    %v88 = vld [vmem:[#allocation5 + $0x20] sm:$0xff]
    %v89 = vld [vmem:[#allocation5 + $0x28] sm:$0xff]
    %v90 = vld [vmem:[#allocation5 + $0x30] sm:$0xff]
    %v91 = vld [vmem:[#allocation5 + $0x38] sm:$0xff]
    %v92 = vld [vmem:[#allocation5 + $0x40] sm:$0xff]
    %v93 = vld [vmem:[#allocation5 + $0x48] sm:$0xff]
    %v94 = vld [vmem:[#allocation5 + $0x50] sm:$0xff]
    %v95 = vld [vmem:[#allocation5 + $0x58] sm:$0xff]
    %v96 = vld [vmem:[#allocation5 + $0x60] sm:$0xff]
    %v97 = vld [vmem:[#allocation5 + $0x68] sm:$0xff]
    %v98 = vld [vmem:[#allocation5 + $0x70] sm:$0xff]
    %v99 = vld [vmem:[#allocation5 + $0x78] sm:$0xff]
    %v100 = vld [vmem:[#allocation7] sm:$0x3]
    %v102 = vperm.slane %v100, 0
    %v103 = vperm.slane %v100, 1
    %v108 = vunpack.c.l.b16 %v82
    %v109 = vunpack.c.l.b16 %v83
    %v110 = vpack.c.b16 %v109, %v108
    %v128 = vunpack.c.l.b16 %v84
    %v129 = vunpack.c.h.b16 %v84
    %v130 = vunpack.c.l.b16 %v85
    %v131 = vunpack.c.h.b16 %v85
    %v132 = vunpack.c.l.b16 %v86
    %v133 = vunpack.c.h.b16 %v86
    %v134 = vunpack.c.l.b16 %v87
    %v135 = vunpack.c.h.b16 %v87
    %v136 = vunpack.c.l.b16 %v88
    %v137 = vunpack.c.h.b16 %v88
    %v138 = vunpack.c.l.b16 %v89
    %v139 = vunpack.c.h.b16 %v89
    %v140 = vunpack.c.l.b16 %v90
    %v141 = vunpack.c.h.b16 %v90
    %v142 = vunpack.c.l.b16 %v91
    %v143 = vunpack.c.h.b16 %v91
    %v144 = vunpack.c.l.b16 %v92
    %v145 = vunpack.c.h.b16 %v92
    %v146 = vunpack.c.l.b16 %v93
    %v147 = vunpack.c.h.b16 %v93
    %v148 = vunpack.c.l.b16 %v94
    %v149 = vunpack.c.h.b16 %v94
    %v150 = vunpack.c.l.b16 %v95
    %v151 = vunpack.c.h.b16 %v95
    %v152 = vunpack.c.l.b16 %v96
    %v153 = vunpack.c.h.b16 %v96
    %v154 = vunpack.c.l.b16 %v97
    %v155 = vunpack.c.h.b16 %v97
    %v156 = vunpack.c.l.b16 %v98
    %v157 = vunpack.c.h.b16 %v98
    %v158 = vunpack.c.l.b16 %v99
    %v159 = vunpack.c.h.b16 %v99
    %v160 = vpack.c.b16 %v130, %v128
    %v161 = vpack.c.b16 %v131, %v129
    %v162 = vpack.c.b16 %v134, %v132
    %v163 = vpack.c.b16 %v135, %v133
    %v164 = vpack.c.b16 %v138, %v136
    %v165 = vpack.c.b16 %v139, %v137
    %v166 = vpack.c.b16 %v142, %v140
    %v167 = vpack.c.b16 %v143, %v141
    %v168 = vpack.c.b16 %v146, %v144
    %v169 = vpack.c.b16 %v147, %v145
    %v170 = vpack.c.b16 %v150, %v148
    %v171 = vpack.c.b16 %v151, %v149
    %v172 = vpack.c.b16 %v154, %v152
    %v173 = vpack.c.b16 %v155, %v153
    %v174 = vpack.c.b16 %v158, %v156
    %v175 = vpack.c.b16 %v159, %v157
    %192 = vmatpush.bf16.msra.mxu0 %v174
    %193 = vmatpush.bf16.msra.mxu0 %v172
    %194 = vmatpush.bf16.msra.mxu0 %v170
    %195 = vmatpush.bf16.msra.mxu0 %v168
    %196 = vmatpush.bf16.msra.mxu0 %v166
    %197 = vmatpush.bf16.msra.mxu0 %v164
    %198 = vmatpush.bf16.msra.mxu0 %v162
    %199 = vmatpush.bf16.msra.mxu0 %v160
    %200 = vmatmul.bf16.gmra.mxu0 %v110
    %v201 = vpop.f32.mrf.mxu0
    %v202 = vadd.f32 %v102, %v201
    %v203 = vpop.f32.mrf.mxu0
    %v204 = vadd.f32 %v102, %v203
    %205 = vdwg.mxu0
    %206 = vmatpush.bf16.msra.mxu0 %v175
    %207 = vmatpush.bf16.msra.mxu0 %v173
    %208 = vmatpush.bf16.msra.mxu0 %v171
    %209 = vmatpush.bf16.msra.mxu0 %v169
    %210 = vmatpush.bf16.msra.mxu0 %v167
    %211 = vmatpush.bf16.msra.mxu0 %v165
    %212 = vmatpush.bf16.msra.mxu0 %v163
    %213 = vmatpush.bf16.msra.mxu0 %v161
    %214 = vmatmul.bf16.gmra.mxu0 %v110
    %v215 = vpop.f32.mrf.mxu0
    %v216 = vadd.f32 %v103, %v215
    %v217 = vpop.f32.mrf.mxu0
    %v218 = vadd.f32 %v103, %v217
    %219 = vdwg.mxu0
    %v220 = vtanh.pop %v202
    %v221 = vtanh.pop %v216
    %v222 = vtanh.pop %v204
    %v223 = vtanh.pop %v218
    %v224 = vpack.c.bf16 %v222, %v220
    %v225 = vpack.c.bf16 %v223, %v221
    %v226 = vld [vmem:[#allocation8] sm:$0xff]
    %v227 = vld [vmem:[#allocation8 + $0x8] sm:$0xff]
    %v228 = vld [vmem:[#allocation8 + $0x10] sm:$0xff]
    %v229 = vld [vmem:[#allocation8 + $0x18] sm:$0xff]
    %v230 = vld [vmem:[#allocation8 + $0x20] sm:$0xff]
    %v231 = vld [vmem:[#allocation8 + $0x28] sm:$0xff]
    %v232 = vld [vmem:[#allocation8 + $0x30] sm:$0xff]
    %v233 = vld [vmem:[#allocation8 + $0x38] sm:$0xff]
    %v234 = vld [vmem:[#allocation8 + $0x40] sm:$0xff]
    %v235 = vld [vmem:[#allocation8 + $0x48] sm:$0xff]
    %v236 = vld [vmem:[#allocation8 + $0x50] sm:$0xff]
    %v237 = vld [vmem:[#allocation8 + $0x58] sm:$0xff]
    %v238 = vld [vmem:[#allocation8 + $0x60] sm:$0xff]
    %v239 = vld [vmem:[#allocation8 + $0x68] sm:$0xff]
    %v240 = vld [vmem:[#allocation8 + $0x70] sm:$0xff]
    %v241 = vld [vmem:[#allocation8 + $0x78] sm:$0xff]
    %v242 = vld [vmem:[#allocation8 + $0x80] sm:$0xff]
    %v243 = vld [vmem:[#allocation8 + $0x88] sm:$0xff]
    %v244 = vld [vmem:[#allocation8 + $0x90] sm:$0xff]
    %v245 = vld [vmem:[#allocation8 + $0x98] sm:$0xff]
    %v246 = vld [vmem:[#allocation8 + $0xa0] sm:$0xff]
    %v247 = vld [vmem:[#allocation8 + $0xa8] sm:$0xff]
    %v248 = vld [vmem:[#allocation8 + $0xb0] sm:$0xff]
    %v249 = vld [vmem:[#allocation8 + $0xb8] sm:$0xff]
    %v250 = vld [vmem:[#allocation8 + $0xc0] sm:$0xff]
    %v251 = vld [vmem:[#allocation8 + $0xc8] sm:$0xff]
    %v252 = vld [vmem:[#allocation8 + $0xd0] sm:$0xff]
    %v253 = vld [vmem:[#allocation8 + $0xd8] sm:$0xff]
    %v254 = vld [vmem:[#allocation8 + $0xe0] sm:$0xff]
    %v255 = vld [vmem:[#allocation8 + $0xe8] sm:$0xff]
    %v256 = vld [vmem:[#allocation8 + $0xf0] sm:$0xff]
    %v257 = vld [vmem:[#allocation8 + $0xf8] sm:$0xff]
    %v258 = vld [vmem:[%s4] sm:$0x3]
    %v260 = vperm.slane %v258, 0
    %v261 = vperm.slane %v258, 1
    %v296 = vunpack.c.l.b16 %v226
    %v297 = vunpack.c.h.b16 %v226
    %v298 = vunpack.c.l.b16 %v227
    %v299 = vunpack.c.h.b16 %v227
    %v300 = vunpack.c.l.b16 %v228
    %v301 = vunpack.c.h.b16 %v228
    %v302 = vunpack.c.l.b16 %v229
    %v303 = vunpack.c.h.b16 %v229
    %v304 = vunpack.c.l.b16 %v230
    %v305 = vunpack.c.h.b16 %v230
    %v306 = vunpack.c.l.b16 %v231
    %v307 = vunpack.c.h.b16 %v231
    %v308 = vunpack.c.l.b16 %v232
    %v309 = vunpack.c.h.b16 %v232
    %v310 = vunpack.c.l.b16 %v233
    %v311 = vunpack.c.h.b16 %v233
    %v312 = vunpack.c.l.b16 %v234
    %v313 = vunpack.c.h.b16 %v234
    %v314 = vunpack.c.l.b16 %v235
    %v315 = vunpack.c.h.b16 %v235
    %v316 = vunpack.c.l.b16 %v236
    %v317 = vunpack.c.h.b16 %v236
    %v318 = vunpack.c.l.b16 %v237
    %v319 = vunpack.c.h.b16 %v237
    %v320 = vunpack.c.l.b16 %v238
    %v321 = vunpack.c.h.b16 %v238
    %v322 = vunpack.c.l.b16 %v239
    %v323 = vunpack.c.h.b16 %v239
    %v324 = vunpack.c.l.b16 %v240
    %v325 = vunpack.c.h.b16 %v240
    %v326 = vunpack.c.l.b16 %v241
    %v327 = vunpack.c.h.b16 %v241
    %v328 = vunpack.c.l.b16 %v242
    %v329 = vunpack.c.h.b16 %v242
    %v330 = vunpack.c.l.b16 %v243
    %v331 = vunpack.c.h.b16 %v243
    %v332 = vunpack.c.l.b16 %v244
    %v333 = vunpack.c.h.b16 %v244
    %v334 = vunpack.c.l.b16 %v245
    %v335 = vunpack.c.h.b16 %v245
    %v336 = vunpack.c.l.b16 %v246
    %v337 = vunpack.c.h.b16 %v246
    %v338 = vunpack.c.l.b16 %v247
    %v339 = vunpack.c.h.b16 %v247
    %v340 = vunpack.c.l.b16 %v248
    %v341 = vunpack.c.h.b16 %v248
    %v342 = vunpack.c.l.b16 %v249
    %v343 = vunpack.c.h.b16 %v249
    %v344 = vunpack.c.l.b16 %v250
    %v345 = vunpack.c.h.b16 %v250
    %v346 = vunpack.c.l.b16 %v251
    %v347 = vunpack.c.h.b16 %v251
    %v348 = vunpack.c.l.b16 %v252
    %v349 = vunpack.c.h.b16 %v252
    %v350 = vunpack.c.l.b16 %v253
    %v351 = vunpack.c.h.b16 %v253
    %v352 = vunpack.c.l.b16 %v254
    %v353 = vunpack.c.h.b16 %v254
    %v354 = vunpack.c.l.b16 %v255
    %v355 = vunpack.c.h.b16 %v255
    %v356 = vunpack.c.l.b16 %v256
    %v357 = vunpack.c.h.b16 %v256
    %v358 = vunpack.c.l.b16 %v257
    %v359 = vunpack.c.h.b16 %v257
    %v360 = vpack.c.b16 %v298, %v296
    %v361 = vpack.c.b16 %v299, %v297
    %v362 = vpack.c.b16 %v302, %v300
    %v363 = vpack.c.b16 %v303, %v301
    %v364 = vpack.c.b16 %v306, %v304
    %v365 = vpack.c.b16 %v307, %v305
    %v366 = vpack.c.b16 %v310, %v308
    %v367 = vpack.c.b16 %v311, %v309
    %v368 = vpack.c.b16 %v314, %v312
    %v369 = vpack.c.b16 %v315, %v313
    %v370 = vpack.c.b16 %v318, %v316
    %v371 = vpack.c.b16 %v319, %v317
    %v372 = vpack.c.b16 %v322, %v320
    %v373 = vpack.c.b16 %v323, %v321
    %v374 = vpack.c.b16 %v326, %v324
    %v375 = vpack.c.b16 %v327, %v325
    %v376 = vpack.c.b16 %v330, %v328
    %v377 = vpack.c.b16 %v331, %v329
    %v378 = vpack.c.b16 %v334, %v332
    %v379 = vpack.c.b16 %v335, %v333
    %v380 = vpack.c.b16 %v338, %v336
    %v381 = vpack.c.b16 %v339, %v337
    %v382 = vpack.c.b16 %v342, %v340
    %v383 = vpack.c.b16 %v343, %v341
    %v384 = vpack.c.b16 %v346, %v344
    %v385 = vpack.c.b16 %v347, %v345
    %v386 = vpack.c.b16 %v350, %v348
    %v387 = vpack.c.b16 %v351, %v349
    %v388 = vpack.c.b16 %v354, %v352
    %v389 = vpack.c.b16 %v355, %v353
    %v390 = vpack.c.b16 %v358, %v356
    %v391 = vpack.c.b16 %v359, %v357
    %424 = vmatpush.bf16.msra.mxu0 %v374
    %425 = vmatpush.bf16.msra.mxu0 %v372
    %426 = vmatpush.bf16.msra.mxu0 %v370
    %427 = vmatpush.bf16.msra.mxu0 %v368
    %428 = vmatpush.bf16.msra.mxu0 %v366
    %429 = vmatpush.bf16.msra.mxu0 %v364
    %430 = vmatpush.bf16.msra.mxu0 %v362
    %431 = vmatpush.bf16.msra.mxu0 %v360
    %432 = vmatmul.bf16.gmra.mxu0 %v224
    %v433 = vpop.f32.mrf.mxu0
    %v434 = vadd.f32 %v260, %v433
    %v435 = vpop.f32.mrf.mxu0
    %v436 = vadd.f32 %v260, %v435
    %437 = vdwg.mxu0
    %438 = vmatpush.bf16.msra.mxu0 %v390
    %439 = vmatpush.bf16.msra.mxu0 %v388
    %440 = vmatpush.bf16.msra.mxu0 %v386
    %441 = vmatpush.bf16.msra.mxu0 %v384
    %442 = vmatpush.bf16.msra.mxu0 %v382
    %443 = vmatpush.bf16.msra.mxu0 %v380
    %444 = vmatpush.bf16.msra.mxu0 %v378
    %445 = vmatpush.bf16.msra.mxu0 %v376
    %446 = vmatmul.bf16.gmra.mxu0 %v225
    %v447 = vpop.f32.mrf.mxu0
    %v448 = vadd.f32 %v434, %v447
    %v449 = vpop.f32.mrf.mxu0
    %v450 = vadd.f32 %v436, %v449
    %451 = vdwg.mxu0
    %452 = vmatpush.bf16.msra.mxu0 %v375
    %453 = vmatpush.bf16.msra.mxu0 %v373
    %454 = vmatpush.bf16.msra.mxu0 %v371
    %455 = vmatpush.bf16.msra.mxu0 %v369
    %456 = vmatpush.bf16.msra.mxu0 %v367
    %457 = vmatpush.bf16.msra.mxu0 %v365
    %458 = vmatpush.bf16.msra.mxu0 %v363
    %459 = vmatpush.bf16.msra.mxu0 %v361
    %460 = vmatmul.bf16.gmra.mxu0 %v224
    %v461 = vpop.f32.mrf.mxu0
    %v462 = vadd.f32 %v261, %v461
    %v463 = vpop.f32.mrf.mxu0
    %v464 = vadd.f32 %v261, %v463
    %465 = vdwg.mxu0
    %466 = vmatpush.bf16.msra.mxu0 %v391
    %467 = vmatpush.bf16.msra.mxu0 %v389
    %468 = vmatpush.bf16.msra.mxu0 %v387
    %469 = vmatpush.bf16.msra.mxu0 %v385
    %470 = vmatpush.bf16.msra.mxu0 %v383
    %471 = vmatpush.bf16.msra.mxu0 %v381
    %472 = vmatpush.bf16.msra.mxu0 %v379
    %473 = vmatpush.bf16.msra.mxu0 %v377
    %474 = vmatmul.bf16.gmra.mxu0 %v225
    %v475 = vpop.f32.mrf.mxu0
    %v476 = vadd.f32 %v462, %v475
    %v477 = vpop.f32.mrf.mxu0
    %v478 = vadd.f32 %v464, %v477
    %479 = vdwg.mxu0
    %v480 = vmul.f32 %v448, 1.442695
    %v481 = vpow.pop %v480
    %v482 = vmul.f32 %v476, 1.442695
    %v483 = vpow.pop %v482
    %v484 = vmul.f32 %v450, 1.442695
    %v485 = vpow.pop %v484
    %v486 = vmul.f32 %v478, 1.442695
    %v487 = vpow.pop %v486
    %488 = vst [vmem:[#allocation10] sm:$0xff] %v481
    %489 = vst [vmem:[#allocation10 + $0x8] sm:$0xff] %v483
    %490 = vst [vmem:[#allocation10 + $0x10] sm:$0xff] %v485
    %491 = vst [vmem:[#allocation10 + $0x18] sm:$0xff] %v487
    // Predicated region
    $region38: #{tpu_custom_call.1} parent=1 // pred_check
      _
    $region39: #{tpu_custom_call.1} parent=1 // pred_check_branch
      %493 = sbr.rel (0) target = $region41
    $region40: #{tpu_custom_call.1} parent=1 // pred_region
      %495 = vsyncadd [#allocation4], 0
      %s496 = sshll.u32 [#allocation10], 4
      %s497 = int_to_ptr.vmem [resolvable:$true] %s496
      %s498 = sshll.u32 %s5, 4
      %s499 = int_to_ptr.hbm [resolvable:$true] %s498
      %504 = dma.vmem_to_hbm [thread:$0]  %s497, 512, %s499, [#allocation4], 256, 256, 16
    $region41: #{tpu_custom_call.1} parent=1 // pred_fallthru
      _
    // Predicated region
    $region42: #{tpu_custom_call.1} parent=1 // pred_check
      _
    $region43: #{tpu_custom_call.1} parent=1 // pred_check_branch
      %506 = sbr.rel (0) target = $region45
    $region44: #{tpu_custom_call.1} parent=1 // pred_region
      %508 = dma.done [#allocation4], 512
    $region45: #{tpu_custom_call.1} parent=1 // pred_fallthru
      _
    %509 = vsyncpa [#allocation3], 1
    %510 = vsyncpa [#allocation6], 1
    %511 = vsyncpa [#allocation9], 1
    %512 = vsyncpa [#allocation4], 1

</llo_original>
